<compile_context>
chip_gen: v6e
topology: v6e:2x2x1
jax: 0.10.0
libtpu: 0.0.40
codegen_flags: <defaults>
</compile_context>

<pallas_src>
import jax
import jax.numpy as jnp
from jax.experimental import pallas as pl
from jax.experimental.pallas import tpu as pltpu


def _round_up(x, m):
    return (x + m - 1) // m * m


def _lora_kernel(x_ref, a_ref, b_ref, o_ref):
    # (tm, rank) intermediate in f32 on the MXU; alpha is pre-folded into B.
    xa = jnp.dot(x_ref[...], a_ref[...], preferred_element_type=jnp.float32)
    y = jnp.dot(xa.astype(b_ref.dtype), b_ref[...],
                preferred_element_type=jnp.float32)
    o_ref[...] = y.astype(o_ref.dtype)


def _tpu_defaults():
    """Per-generation VMEM limit / buffering depth / core count."""
    vmem_cap = 128 * 1024 * 1024
    try:
        info = pltpu.get_tpu_info()
        vmem_cap = int(getattr(info, "vmem_capacity_bytes", vmem_cap))
    except Exception:
        pass
    if vmem_cap <= 64 * 1024 * 1024:
        # v7x-class: 64 MiB VMEM/TC, 2 TensorCores -> conservative scoped limit,
        # default 2-deep buffering (spend VMEM on tile size), split grid across cores.
        return {"vmem_limit_bytes": 48 * 1024 * 1024, "x_bufs": 2, "num_cores": 2}
    # v5e/v6e: 128 MiB VMEM, 1 TC -> larger scoped limit, deeper input buffering.
    return {"vmem_limit_bytes": 96 * 1024 * 1024, "x_bufs": 3, "num_cores": 1}


def _choose_tm(M, in_dim, out_dim, rank, x_dsize, out_dsize, vmem_budget, *,
               sublane=8, x_bufs=2, num_cores=1,
               target_x_bytes=4 * 1024 * 1024, tm_max=2048):
    """Row tile sized by bytes-per-step, bounded by the VMEM budget."""
    # Resident A/B (double-buffered by the pipeline) + per-row streamed bytes.
    static = 2 * (in_dim * rank + rank * out_dim) * x_dsize
    per_row = (x_bufs * in_dim * x_dsize                 # streamed x buffers
               + 2 * out_dim * out_dsize                 # output double buffer
               + (out_dim + rank) * 4)                   # f32 temporaries
    tm_vmem = max((vmem_budget - static) // per_row, sublane)
    # Amortise per-step pipeline overhead: aim for a few MB of x per step, so
    # narrow in_dim gets a much larger row tile than a fixed 512-row cap.
    tm_bytes = max(target_x_bytes // max(in_dim * x_dsize, 1), sublane)
    tm = min(tm_vmem, tm_bytes, tm_max)

    m_ceil = _round_up(M, sublane)
    if num_cores > 1 and m_ceil >= 2 * 128:
        # Keep >= num_cores grid steps so every TensorCore / DMA stream works.
        tm = min(tm, _round_up(pl.cdiv(m_ceil, num_cores), sublane))
    tm = min(tm, m_ceil)

    if tm >= 256:
        tm = tm // 128 * 128
    else:
        tm = max(tm // sublane * sublane, sublane)
    return int(tm)


def lora_forward(x, A, B, alpha, *, tm=None, out_dtype=None,
                 vmem_limit_bytes=None, x_bufs=None):
    """alpha * (x @ A @ B) via a Pallas kernel tiled over the batch dim."""
    orig_shape = x.shape
    if x.ndim > 2:
        x = x.reshape(-1, orig_shape[-1])
    M, in_dim = x.shape
    in_dim_a, rank = A.shape
    rank_b, out_dim = B.shape
    assert in_dim == in_dim_a and rank == rank_b

    if out_dtype is None:
        out_dtype = x.dtype

    # A/B are tiny (LoRA): cast them to x's dtype in the wrapper (free) and fold
    # alpha into B in f32 so there is no per-tile VALU scaling in the kernel.
    # x itself is streamed in the caller's dtype -- no extra HBM pass to recast it.
    A = A.astype(x.dtype)
    B = (jnp.float32(alpha) * B.astype(jnp.float32)).astype(x.dtype)

    defaults = _tpu_defaults()
    if vmem_limit_bytes is None:
        vmem_limit_bytes = defaults["vmem_limit_bytes"]
    if x_bufs is None:
        x_bufs = defaults["x_bufs"]

    x_dsize = jnp.dtype(x.dtype).itemsize
    out_dsize = jnp.dtype(out_dtype).itemsize
    sublane = 8 * max(4 // x_dsize, 1)

    if tm is None:
        tm = _choose_tm(M, in_dim, out_dim, rank, x_dsize, out_dsize,
                        int(vmem_limit_bytes * 0.8), sublane=sublane,
                        x_bufs=x_bufs, num_cores=defaults["num_cores"])
    tm = max(_round_up(min(tm, _round_up(M, sublane)), sublane), sublane)

    # Ragged batch: no wrapper padding -- Pallas masks the trailing partial block.
    num_steps = pl.cdiv(M, tm)

    # Deeper buffering on the streamed operand only where it pays (v5e/v6e).
    x_spec = pl.BlockSpec((tm, in_dim), lambda i: (i, 0))
    if x_bufs > 2 and num_steps >= x_bufs and hasattr(pl, "Buffered"):
        try:
            x_spec = pl.BlockSpec((tm, in_dim), lambda i: (i, 0),
                                  pipeline_mode=pl.Buffered(x_bufs))
        except TypeError:
            pass

    cost_estimate = pl.CostEstimate(
        flops=2 * M * rank * (in_dim + out_dim),
        transcendentals=0,
        bytes_accessed=(M * in_dim * x_dsize
                        + (in_dim * rank + rank * out_dim) * x_dsize
                        + M * out_dim * out_dsize),
    )

    # TODO(synk): if this layer is ever used with out_dim < 128 / not a multiple
    # of 128, fold heads / reshape in the wrapper so the output stays lane-dense.
    out = pl.pallas_call(
        _lora_kernel,
        out_shape=jax.ShapeDtypeStruct((M, out_dim), out_dtype),
        grid_spec=pltpu.PrefetchScalarGridSpec(
            num_scalar_prefetch=0,
            grid=(num_steps,),
            in_specs=[
                x_spec,
                # A and B are small (LoRA) -- keep them fully resident.
                pl.BlockSpec((in_dim, rank), lambda i: (0, 0)),
                pl.BlockSpec((rank, out_dim), lambda i: (0, 0)),
            ],
            out_specs=pl.BlockSpec((tm, out_dim), lambda i: (i, 0)),
        ),
        compiler_params=pltpu.CompilerParams(
            dimension_semantics=("parallel",),
            vmem_limit_bytes=int(vmem_limit_bytes),
        ),
        cost_estimate=cost_estimate,
    )(x, A, B)

    if len(orig_shape) > 2:
        out = out.reshape(orig_shape[:-1] + (out_dim,))
    return out


if __name__ == "__main__":
    key = jax.random.PRNGKey(0)
    kx, ka, kb, kx2 = jax.random.split(key, 4)
    hp = jax.lax.Precision.HIGHEST

    # --- Test 1: module-sized shapes, f32, random B so the full path is exercised ---
    batch, in_dim, out_dim, rank, alpha = 16, 32, 128, 8, 4.0
    std_dev = 1.0 / jnp.sqrt(jnp.float32(rank))
    A = jax.random.normal(ka, (in_dim, rank), dtype=jnp.float32) * std_dev
    B = jax.random.normal(kb, (rank, out_dim), dtype=jnp.float32)
    x = jax.random.normal(kx, (batch, in_dim), dtype=jnp.float32)

    y = jax.block_until_ready(lora_forward(x, A, B, alpha))
    y_ref = alpha * jnp.dot(jnp.dot(x, A, precision=hp), B, precision=hp)
    assert y.shape == (batch, out_dim)
    scale = jnp.max(jnp.abs(y_ref)) + 1e-6
    assert jnp.max(jnp.abs(y - y_ref)) / scale < 2e-3, "f32 mismatch"

    # --- Test 2: LoRA init (B = 0) must give exactly zero output ---
    y0 = jax.block_until_ready(
        lora_forward(x, A, jnp.zeros((rank, out_dim), jnp.float32), alpha))
    assert jnp.all(y0 == 0.0)

    # --- Test 3: ragged batch (not a multiple of the tile), multi-step grid,
    #             no wrapper-side padding/slicing ---
    M2, in2, out2, r2 = 300, 128, 256, 8
    k1, k2, k3 = jax.random.split(kx2, 3)
    x2 = jax.random.normal(k1, (M2, in2), dtype=jnp.float32)
    A2 = jax.random.normal(k2, (in2, r2), dtype=jnp.float32) / jnp.sqrt(jnp.float32(r2))
    B2 = jax.random.normal(k3, (r2, out2), dtype=jnp.float32)
    y2 = jax.block_until_ready(lora_forward(x2, A2, B2, alpha, tm=128))
    y2_ref = alpha * jnp.dot(jnp.dot(x2, A2, precision=hp), B2, precision=hp)
    scale2 = jnp.max(jnp.abs(y2_ref)) + 1e-6
    assert y2.shape == (M2, out2)
    assert jnp.max(jnp.abs(y2 - y2_ref)) / scale2 < 2e-3, "ragged f32 mismatch"

    # --- Test 4: x already bf16 upstream (the mem-bound fast path); params are
    #             cast in the wrapper, output defaults to bf16 ---
    x2b = x2.astype(jnp.bfloat16)
    y2b = jax.block_until_ready(lora_forward(x2b, A2, B2, alpha))
    assert y2b.dtype == jnp.bfloat16
    assert jnp.max(jnp.abs(y2b.astype(jnp.float32) - y2_ref)) / scale2 < 3e-2, \
        "bf16 mismatch"

    print("KERNEL_OK")
</pallas_src>

<mosaic_0001>
module attributes {stable_mosaic.version = 11 : i64} {
  func.func @_lora_kernel(%arg0: i32, %arg1: memref<16x32xf32, #tpu.memory_space<vmem>>, %arg2: memref<32x8xf32, #tpu.memory_space<vmem>>, %arg3: memref<8x128xf32, #tpu.memory_space<vmem>>, %arg4: memref<16x128xf32, #tpu.memory_space<vmem>>) attributes {dimension_semantics = [#tpu.dimension_semantics<parallel>], iteration_bounds = array<i64: 1>, scalar_prefetch = 0 : i64, scratch_operands = 0 : i64, tpu.core_type = #tpu.core_type<tc>, window_params = [{transform_indices = @transform_0, window_bounds = array<i64: 16, 32>}, {pipeline_mode = #tpu.pipeline_mode<synchronous>, transform_indices = @transform_1, window_bounds = array<i64: 32, 8>}, {pipeline_mode = #tpu.pipeline_mode<synchronous>, transform_indices = @transform_2, window_bounds = array<i64: 8, 128>}, {transform_indices = @transform_3, window_bounds = array<i64: 16, 128>}]} {
    %c0 = arith.constant 0 : index
    %c0_0 = arith.constant 0 : index
    %0 = vector.load %arg1[%c0, %c0_0] : memref<16x32xf32, #tpu.memory_space<vmem>>, vector<16x32xf32>
    %c0_1 = arith.constant 0 : index
    %c0_2 = arith.constant 0 : index
    %1 = vector.load %arg2[%c0_1, %c0_2] : memref<32x8xf32, #tpu.memory_space<vmem>>, vector<32x8xf32>
    %cst = arith.constant dense<0.000000e+00> : vector<16x8xf32>
    %2 = tpu.matmul %0, %1, %cst {dimension_numbers = #tpu.dot_dimension_numbers<[1], [0], [0], [1], [0, 0, 1, 1], [], []>} : vector<16x32xf32>, vector<32x8xf32>, vector<16x8xf32> -> vector<16x8xf32>
    %c0_3 = arith.constant 0 : index
    %c0_4 = arith.constant 0 : index
    %3 = vector.load %arg3[%c0_3, %c0_4] : memref<8x128xf32, #tpu.memory_space<vmem>>, vector<8x128xf32>
    %cst_5 = arith.constant dense<0.000000e+00> : vector<16x128xf32>
    %4 = tpu.matmul %2, %3, %cst_5 {dimension_numbers = #tpu.dot_dimension_numbers<[1], [0], [0], [1], [0, 0, 1, 1], [], []>} : vector<16x8xf32>, vector<8x128xf32>, vector<16x128xf32> -> vector<16x128xf32>
    %c0_6 = arith.constant 0 : index
    %c0_7 = arith.constant 0 : index
    %5 = vector.load %arg4[%c0_6, %c0_7] : memref<16x128xf32, #tpu.memory_space<vmem>>, vector<16x128xf32>
    tpu.vector_store %arg4[%c0_6, %c0_7], %4 {strides = array<i32>} : memref<16x128xf32, #tpu.memory_space<vmem>>, vector<16x128xf32>,
    return
  }
  func.func @transform_0(%arg0: i32) -> (i32, i32) {
    %c0_i32 = arith.constant 0 : i32
    %c0_i32_0 = arith.constant 0 : i32
    return %arg0, %c0_i32 : i32, i32
  }
  func.func @transform_1(%arg0: i32) -> (i32, i32) {
    %c0_i32 = arith.constant 0 : i32
    %c0_i32_0 = arith.constant 0 : i32
    %c0_i32_1 = arith.constant 0 : i32
    return %c0_i32, %c0_i32_0 : i32, i32
  }
  func.func @transform_2(%arg0: i32) -> (i32, i32) {
    %c0_i32 = arith.constant 0 : i32
    %c0_i32_0 = arith.constant 0 : i32
    %c0_i32_1 = arith.constant 0 : i32
    return %c0_i32, %c0_i32_0 : i32, i32
  }
  func.func @transform_3(%arg0: i32) -> (i32, i32) {
    %c0_i32 = arith.constant 0 : i32
    %c0_i32_0 = arith.constant 0 : i32
    return %arg0, %c0_i32 : i32, i32
  }
}

</mosaic_0001>

<llo_original>
// kernel: tpu_custom_call.1
$region0: #{tpu_custom_call.1}
  #allocation0 [shape = 'u32[]', space=smem, size = 0x4, offset = 0x4, fixed_abs, tag = 'smem constant byte address 0x4 - core index']
  #allocation1 [shape = 'u32[144,128]{1,0:T(1,128)}', space=vmem, size = 0x12000, scoped, tag = 'internal scratch']
  %s0 = inlined_call_operand.vmem [shape: f32[16,32], index: 0, kind: input, shape index: {}]
  %s1 = inlined_call_operand.vmem [shape: f32[32,8], index: 1, kind: input, shape index: {}]
  %s2 = inlined_call_operand.vmem [shape: f32[8,128], index: 2, kind: input, shape index: {}]
  %s3 = inlined_call_operand.hbm [shape: f32[16,128], index: 3, kind: output, shape index: {}]
  %s4 = sld [smem:[#allocation0]]
  $region22: #{tpu_custom_call.1} parent=0
    _
  %s6 = ssub.s32 1, %s4
  %s7 = scalar_select 0, %s6, %s4
  $region1: #{tpu_custom_call.1} parent=0
    #allocation2 [shape = 'u8[8192]{0}', space=vmem, size = 0x2000, scoped, tag = 'output window, operand 0, single buffered']
    #allocation3 [shape = 's32[1]{0}', space=sflag, size = 0x4, scoped, tag = 'scoped memory for tpu_custom_call.1']
    %8 = vsyncpa [#allocation3], 0
    // Predicated region
    $region2: #{tpu_custom_call.1} parent=1 // pred_check
      _
    $region3: #{tpu_custom_call.1} parent=1 // pred_check_branch
      %10 = sbr.rel (0) target = $region5
    $region4: #{tpu_custom_call.1} parent=1 // pred_region
      _
    $region5: #{tpu_custom_call.1} parent=1 // pred_fallthru
      _
    // Predicated region
    $region6: #{tpu_custom_call.1} parent=1 // pred_check
      _
    $region7: #{tpu_custom_call.1} parent=1 // pred_check_branch
      %12 = sbr.rel (0) target = $region9
    $region8: #{tpu_custom_call.1} parent=1 // pred_region
      _
    $region9: #{tpu_custom_call.1} parent=1 // pred_fallthru
      _
    // Predicated region
    $region10: #{tpu_custom_call.1} parent=1 // pred_check
      _
    $region11: #{tpu_custom_call.1} parent=1 // pred_check_branch
      %14 = sbr.rel (0) target = $region13
    $region12: #{tpu_custom_call.1} parent=1 // pred_region
      _
    $region13: #{tpu_custom_call.1} parent=1 // pred_fallthru
      _
    %v15 = vld [vmem:[%s0] sm:$0xff]
    %v16 = vld [vmem:[%s0 + $0x8] sm:$0xff]
    %v17 = vld [vmem:[%s1] sm:$0xff]
    %v18 = vld [vmem:[%s1 + $0x8] sm:$0xff]
    %v19 = vld [vmem:[%s1 + $0x10] sm:$0xff]
    %v20 = vld [vmem:[%s1 + $0x18] sm:$0xff]
    %vm21 = vcmask 261120
    %v23 = vsel %vm21, %v15, 0
    %v26 = vsel %vm21, %v16, 0
    %28 = vmatprep.subr.mxu0 0.0
    %29 = vmatpush1.msra.mxu0 0.0
    %30 = vmatprep.subr.mxu0 0.0
    %31 = vmatpush1.msra.mxu0 0.0
    %32 = vmatprep.subr.mxu0 0.0
    %33 = vmatpush1.msra.mxu0 0.0
    %34 = vmatprep.subr.mxu0 0.0
    %35 = vmatpush1.msra.mxu0 0.0
    %36 = vmatprep.subr.mxu0 0.0
    %37 = vmatpush1.msra.mxu0 0.0
    %38 = vmatprep.subr.mxu0 0.0
    %39 = vmatpush1.msra.mxu0 0.0
    %40 = vmatprep.subr.mxu0 0.0
    %41 = vmatpush1.msra.mxu0 0.0
    %42 = vmatprep.subr.mxu0 0.0
    %43 = vmatpush1.msra.mxu0 0.0
    %44 = vmatprep.subr.mxu0 0.0
    %45 = vmatpush1.msra.mxu0 0.0
    %46 = vmatprep.subr.mxu0 0.0
    %47 = vmatpush1.msra.mxu0 0.0
    %48 = vmatprep.subr.mxu0 0.0
    %49 = vmatpush1.msra.mxu0 0.0
    %50 = vmatprep.subr.mxu0 0.0
    %51 = vmatpush1.msra.mxu0 0.0
    %52 = vmatprep.subr.mxu0 0.0
    %53 = vmatpush1.msra.mxu0 %v20
    %54 = vmatprep.subr.mxu0 0.0
    %55 = vmatpush1.msra.mxu0 %v19
    %56 = vmatprep.subr.mxu0 0.0
    %57 = vmatpush1.msra.mxu0 %v18
    %58 = vmatprep.subr.mxu0 0.0
    %59 = vmatpush1.msra.mxu0 %v17
    %60 = vmatprep.subr.mxu0 0.0
    %61 = vmatpush2.msra.mxu0 0.0
    %62 = vmatprep.subr.mxu0 0.0
    %63 = vmatpush2.msra.mxu0 0.0
    %64 = vmatprep.subr.mxu0 0.0
    %65 = vmatpush2.msra.mxu0 0.0
    %66 = vmatprep.subr.mxu0 0.0
    %67 = vmatpush2.msra.mxu0 0.0
    %68 = vmatprep.subr.mxu0 0.0
    %69 = vmatpush2.msra.mxu0 0.0
    %70 = vmatprep.subr.mxu0 0.0
    %71 = vmatpush2.msra.mxu0 0.0
    %72 = vmatprep.subr.mxu0 0.0
    %73 = vmatpush2.msra.mxu0 0.0
    %74 = vmatprep.subr.mxu0 0.0
    %75 = vmatpush2.msra.mxu0 0.0
    %76 = vmatprep.subr.mxu0 0.0
    %77 = vmatpush2.msra.mxu0 0.0
    %78 = vmatprep.subr.mxu0 0.0
    %79 = vmatpush2.msra.mxu0 0.0
    %80 = vmatprep.subr.mxu0 0.0
    %81 = vmatpush2.msra.mxu0 0.0
    %82 = vmatprep.subr.mxu0 0.0
    %83 = vmatpush2.msra.mxu0 0.0
    %84 = vmatprep.subr.mxu0 0.0
    %85 = vmatpush2.msra.mxu0 0.0
    %86 = vmatprep.subr.mxu0 0.0
    %87 = vmatpush2.msra.mxu0 0.0
    %88 = vmatprep.subr.mxu0 0.0
    %89 = vmatpush2.msra.mxu0 0.0
    %90 = vmatprep.subr.mxu0 0.0
    %91 = vmatpush2.msra.mxu0 0.0
    %92 = vmatprep.mubr.f32.mxu0 0.0
    %93 = vmatmul.mubr.f32.gmra.mxu0 %v23
    %v94 = vpop.f32.mrf.mxu0
    %v95 = vadd.f32 0.0, %v94
    %v96 = vpop.f32.mrf.mxu0
    %97 = vmatprep.mubr.f32.mxu0 0.0
    %98 = vmatmul.mubr.f32.gmra.mxu0 %v26
    %v99 = vpop.f32.mrf.mxu0
    %v100 = vadd.f32 0.0, %v99
    %v101 = vpop.f32.mrf.mxu0
    %102 = vdwg.mxu0
    %v103 = vld [vmem:[%s2] sm:$0xff]
    %vm104 = vcmask 64512
    %v106 = vsel %vm104, %v95, 0
    %v109 = vsel %vm104, %v100, 0
    %111 = vmatprep.subr.mxu0 0.0
    %112 = vmatpush1.msra.mxu0 0.0
    %113 = vmatprep.subr.mxu0 0.0
    %114 = vmatpush1.msra.mxu0 0.0
    %115 = vmatprep.subr.mxu0 0.0
    %116 = vmatpush1.msra.mxu0 0.0
    %117 = vmatprep.subr.mxu0 0.0
    %118 = vmatpush1.msra.mxu0 0.0
    %119 = vmatprep.subr.mxu0 0.0
    %120 = vmatpush1.msra.mxu0 0.0
    %121 = vmatprep.subr.mxu0 0.0
    %122 = vmatpush1.msra.mxu0 0.0
    %123 = vmatprep.subr.mxu0 0.0
    %124 = vmatpush1.msra.mxu0 0.0
    %125 = vmatprep.subr.mxu0 0.0
    %126 = vmatpush1.msra.mxu0 0.0
    %127 = vmatprep.subr.mxu0 0.0
    %128 = vmatpush1.msra.mxu0 0.0
    %129 = vmatprep.subr.mxu0 0.0
    %130 = vmatpush1.msra.mxu0 0.0
    %131 = vmatprep.subr.mxu0 0.0
    %132 = vmatpush1.msra.mxu0 0.0
    %133 = vmatprep.subr.mxu0 0.0
    %134 = vmatpush1.msra.mxu0 0.0
    %135 = vmatprep.subr.mxu0 0.0
    %136 = vmatpush1.msra.mxu0 0.0
    %137 = vmatprep.subr.mxu0 0.0
    %138 = vmatpush1.msra.mxu0 0.0
    %139 = vmatprep.subr.mxu0 0.0
    %140 = vmatpush1.msra.mxu0 0.0
    %141 = vmatprep.subr.mxu0 0.0
    %142 = vmatpush1.msra.mxu0 %v103
    %143 = vmatprep.subr.mxu0 0.0
    %144 = vmatpush2.msra.mxu0 0.0
    %145 = vmatprep.subr.mxu0 0.0
    %146 = vmatpush2.msra.mxu0 0.0
    %147 = vmatprep.subr.mxu0 0.0
    %148 = vmatpush2.msra.mxu0 0.0
    %149 = vmatprep.subr.mxu0 0.0
    %150 = vmatpush2.msra.mxu0 0.0
    %151 = vmatprep.subr.mxu0 0.0
    %152 = vmatpush2.msra.mxu0 0.0
    %153 = vmatprep.subr.mxu0 0.0
    %154 = vmatpush2.msra.mxu0 0.0
    %155 = vmatprep.subr.mxu0 0.0
    %156 = vmatpush2.msra.mxu0 0.0
    %157 = vmatprep.subr.mxu0 0.0
    %158 = vmatpush2.msra.mxu0 0.0
    %159 = vmatprep.subr.mxu0 0.0
    %160 = vmatpush2.msra.mxu0 0.0
    %161 = vmatprep.subr.mxu0 0.0
    %162 = vmatpush2.msra.mxu0 0.0
    %163 = vmatprep.subr.mxu0 0.0
    %164 = vmatpush2.msra.mxu0 0.0
    %165 = vmatprep.subr.mxu0 0.0
    %166 = vmatpush2.msra.mxu0 0.0
    %167 = vmatprep.subr.mxu0 0.0
    %168 = vmatpush2.msra.mxu0 0.0
    %169 = vmatprep.subr.mxu0 0.0
    %170 = vmatpush2.msra.mxu0 0.0
    %171 = vmatprep.subr.mxu0 0.0
    %172 = vmatpush2.msra.mxu0 0.0
    %173 = vmatprep.subr.mxu0 0.0
    %174 = vmatpush2.msra.mxu0 0.0
    %175 = vmatprep.mubr.f32.mxu0 0.0
    %176 = vmatmul.mubr.f32.gmra.mxu0 %v106
    %v177 = vpop.f32.mrf.mxu0
    %v178 = vadd.f32 0.0, %v177
    %v179 = vpop.f32.mrf.mxu0
    %180 = vmatprep.mubr.f32.mxu0 0.0
    %181 = vmatmul.mubr.f32.gmra.mxu0 %v109
    %v182 = vpop.f32.mrf.mxu0
    %v183 = vadd.f32 0.0, %v182
    %v184 = vpop.f32.mrf.mxu0
    %185 = vdwg.mxu0
    %186 = vst [vmem:[#allocation2] sm:$0xff] %v178
    %187 = vst [vmem:[#allocation2 + $0x8] sm:$0xff] %v183
    // Predicated region
    $region14: #{tpu_custom_call.1} parent=1 // pred_check
      _
    $region15: #{tpu_custom_call.1} parent=1 // pred_check_branch
      %189 = sbr.rel (0) target = $region17
    $region16: #{tpu_custom_call.1} parent=1 // pred_region
      %s191 = ssub.s32 256, 256
      %192 = vsyncadd [#allocation3], %s191
      %s193 = sshll.u32 [#allocation2], 4
      %s194 = int_to_ptr.vmem [resolvable:$true] %s193
      %199 = dma.vmem_to_hbm [thread:$0]  %s194, 256, %s3, [#allocation3], 128, 128, 8
    $region17: #{tpu_custom_call.1} parent=1 // pred_fallthru
      _
    // Predicated region
    $region18: #{tpu_custom_call.1} parent=1 // pred_check
      _
    $region19: #{tpu_custom_call.1} parent=1 // pred_check_branch
      %201 = sbr.rel (0) target = $region21
    $region20: #{tpu_custom_call.1} parent=1 // pred_region
      %202 = dma.done [#allocation3], 256
    $region21: #{tpu_custom_call.1} parent=1 // pred_fallthru
      _
    %203 = vsyncpa [#allocation3], 1

</llo_original>
